<compile_context>
chip_gen: v7x
topology: tpu7x:2x2x1
jax: 0.10.0
libtpu: 0.0.40
codegen_flags: <defaults>
</compile_context>

<pallas_src>
import functools

import jax
import jax.numpy as jnp
import numpy as np
from jax.experimental import pallas as pl
from jax.experimental.pallas import tpu as pltpu

_LANE = 128


def _pair(v):
    return (v, v) if isinstance(v, int) else (int(v[0]), int(v[1]))


def _pad4(padding):
    """Returns ((pad_top, pad_bottom), (pad_left, pad_right))."""
    if isinstance(padding, int):
        return (padding, padding), (padding, padding)
    p = tuple(int(v) for v in padding)
    if len(p) == 2:                      # nn.Conv2d-style symmetric (ph, pw)
        return (p[0], p[0]), (p[1], p[1])
    if len(p) == 4:                      # nn.ZeroPad2d order (l, r, t, b)
        return (p[2], p[3]), (p[0], p[1])
    raise ValueError(f"bad padding {padding!r}")


def _conv_bn_act_kernel(p_ref, w_ref, g_ref, b_ref, o_ref, sum_ref, ssq_ref,
                        *, inv_m, eps, use_bn, use_relu):
    """One grid step = (phase, lane_tile).

    p_ref : (Kp, tm)    bf16  im2col patches (lanes = flattened N*Ho*Wo)
    w_ref : (C_out, Kp) bf16  flattened conv weight
    g_ref : (C_out, 1)  f32   BN gamma
    b_ref : (C_out, 1)  f32   BN beta
    o_ref : (C_out, tm) f32   output tile (lane-dense store)
    sum_ref / ssq_ref : (C_out, 1) f32 persistent scratch accumulators
    """
    phase = pl.program_id(0)
    tile = pl.program_id(1)

    # Whole convolution for this tile: ONE lane-dense MXU matmul,
    # bf16 operands, f32 accumulation.
    y = jnp.dot(w_ref[...], p_ref[...], preferred_element_type=jnp.float32)

    if not use_bn:
        o_ref[...] = jnp.maximum(y, 0.0) if use_relu else y
        return

    @pl.when(jnp.logical_and(phase == 0, tile == 0))
    def _init():
        sum_ref[...] = jnp.zeros_like(sum_ref)
        ssq_ref[...] = jnp.zeros_like(ssq_ref)

    @pl.when(phase == 0)
    def _stats():
        # Fused single pass over the in-register conv tile (lane reductions
        # go to the XLU slot, which has slack here).
        sum_ref[...] += jnp.sum(y, axis=1, keepdims=True)
        ssq_ref[...] += jnp.sum(y * y, axis=1, keepdims=True)
        # The pipeline flushes this output block once its index changes
        # regardless; write the raw conv tile so the flushed bytes are
        # deterministic.  Phase 1 overwrites it with the normalized result.
        o_ref[...] = y

    @pl.when(phase == 1)
    def _apply():
        mean = sum_ref[...] * inv_m
        var = ssq_ref[...] * inv_m - mean * mean     # biased var (BN training)
        scale = g_ref[...] * jax.lax.rsqrt(var + eps)
        shift = b_ref[...] - mean * scale
        out = y * scale + shift
        if use_relu:
            out = jnp.maximum(out, 0.0)
        o_ref[...] = out


@functools.partial(
    jax.jit,
    static_argnames=("stride", "padding", "dilation", "bn_eps", "use_bn",
                     "activation", "lane_tile"))
def conv_block(x, weight, gamma, beta, *, stride=1, padding=1, dilation=1,
               bn_eps=1e-5, use_bn=True, activation=True, lane_tile=None):
    """ConvBlock forward. x: (N, C_in, H, W) f32; weight: (C_out, C_in, kH, kW)."""
    N, C_in, H, W = x.shape
    C_out, C_in_w, kH, kW = weight.shape
    if C_in_w != C_in:
        raise NotImplementedError("groups > 1 not supported")  # TODO(synk)
    sh, sw = _pair(stride)
    dh, dw = _pair(dilation)
    (pt, pb), (pleft, pright) = _pad4(padding)

    Ho = (H + pt + pb - dh * (kH - 1) - 1) // sh + 1
    Wo = (W + pleft + pright - dw * (kW - 1) - 1) // sw + 1
    M = N * Ho * Wo
    K = kH * kW * C_in

    x = x.astype(jnp.float32)
    xp = jnp.pad(x, ((0, 0), (0, 0), (pt, pb), (pleft, pright)))

    # im2col with channels on sublanes and flattened (N, Ho, Wo) on lanes.
    taps = []
    for kh in range(kH):
        for kw in range(kW):
            h0, w0 = kh * dh, kw * dw
            sl = xp[:, :, h0:h0 + sh * (Ho - 1) + 1:sh,
                    w0:w0 + sw * (Wo - 1) + 1:sw]           # (N, C_in, Ho, Wo)
            taps.append(jnp.transpose(sl, (1, 0, 2, 3)).reshape(C_in, M))
    patches = jnp.concatenate(taps, axis=0)                 # (K, M)
    w_mat = jnp.transpose(weight.astype(jnp.float32),
                          (0, 2, 3, 1)).reshape(C_out, K)   # (C_out, K)

    # Pad K to a multiple of 16 (bf16 sublane packing) and M to a multiple of
    # 128 (lane tile).  Zero rows/columns are exactly BN-neutral.
    Kp = ((K + 15) // 16) * 16
    if Kp != K:
        patches = jnp.pad(patches, ((0, Kp - K), (0, 0)))
        w_mat = jnp.pad(w_mat, ((0, 0), (0, Kp - K)))
    Mp = ((M + _LANE - 1) // _LANE) * _LANE
    if Mp != M:
        patches = jnp.pad(patches, ((0, 0), (0, Mp - M)))

    # Lane-tile size: largest multiple of 128 dividing Mp within a small VMEM
    # block budget (double-buffered blocks stay tiny even for v7x's 64 MiB).
    if lane_tile is None:
        budget = 4 * 1024 * 1024
        per_col = 2 * (Kp * 2 + C_out * 4)   # 2x-buffered bf16 in + f32 out
        tm = min(Mp, max(_LANE, (budget // per_col) // _LANE * _LANE))
    else:
        tm = int(lane_tile)
    while Mp % tm:
        tm -= _LANE
    n_tiles = Mp // tm

    patches_bf16 = patches.astype(jnp.bfloat16)
    w_bf16 = w_mat.astype(jnp.bfloat16)
    if use_bn:
        g2 = gamma.astype(jnp.float32).reshape(C_out, 1)
        b2 = beta.astype(jnp.float32).reshape(C_out, 1)
    else:
        g2 = jnp.ones((C_out, 1), jnp.float32)
        b2 = jnp.zeros((C_out, 1), jnp.float32)

    n_phases = 2 if use_bn else 1
    kernel = functools.partial(
        _conv_bn_act_kernel, inv_m=1.0 / float(M), eps=float(bn_eps),
        use_bn=bool(use_bn), use_relu=bool(activation))

    out2d = pl.pallas_call(
        kernel,
        out_shape=jax.ShapeDtypeStruct((C_out, Mp), jnp.float32),
        grid_spec=pltpu.PrefetchScalarGridSpec(
            num_scalar_prefetch=0,
            grid=(n_phases, n_tiles),
            in_specs=[
                pl.BlockSpec((Kp, tm), lambda p, t: (0, t)),      # patches
                pl.BlockSpec((C_out, Kp), lambda p, t: (0, 0)),   # weights
                pl.BlockSpec((C_out, 1), lambda p, t: (0, 0)),    # gamma
                pl.BlockSpec((C_out, 1), lambda p, t: (0, 0)),    # beta
            ],
            out_specs=pl.BlockSpec((C_out, tm), lambda p, t: (0, t)),
            scratch_shapes=[pltpu.VMEM((C_out, 1), jnp.float32),
                            pltpu.VMEM((C_out, 1), jnp.float32)],
        ),
        compiler_params=pltpu.CompilerParams(
            # Global BN statistics force sequential grid axes; without BN the
            # lane-tile axis is embarrassingly parallel (megacore-friendly).
            dimension_semantics=(("arbitrary", "arbitrary") if use_bn
                                 else ("arbitrary", "parallel")),
            vmem_limit_bytes=32 * 1024 * 1024,
        ),
    )(patches_bf16, w_bf16, g2, b2)

    out = out2d[:, :M].reshape(C_out, N, Ho, Wo)
    return jnp.transpose(out, (1, 0, 2, 3))                 # NCHW


def conv_block_reference(x, weight, gamma, beta, *, stride=1, padding=1,
                         dilation=1, bn_eps=1e-5, use_bn=True, activation=True):
    """Pure-JAX f32 reference matching PyTorch ConvBlock forward (train mode)."""
    sh, sw = _pair(stride)
    dh, dw = _pair(dilation)
    (pt, pb), (pleft, pright) = _pad4(padding)
    y = jax.lax.conv_general_dilated(
        x.astype(jnp.float32), weight.astype(jnp.float32),
        window_strides=(sh, sw), padding=((pt, pb), (pleft, pright)),
        rhs_dilation=(dh, dw),
        dimension_numbers=("NCHW", "OIHW", "NCHW"),
        precision=jax.lax.Precision.HIGHEST)
    if use_bn:
        m = jnp.mean(y, axis=(0, 2, 3), keepdims=True)
        v = jnp.mean((y - m) ** 2, axis=(0, 2, 3), keepdims=True)
        y = (y - m) * (gamma.reshape(1, -1, 1, 1) * jax.lax.rsqrt(v + bn_eps)) \
            + beta.reshape(1, -1, 1, 1)
    if activation:
        y = jax.nn.relu(y)
    return y


if __name__ == "__main__":
    key = jax.random.PRNGKey(0)
    ks = jax.random.split(key, 7)

    N, C_in, H, W = 2, 4, 16, 16
    C_out = 4
    x = jax.random.normal(ks[0], (N, C_in, H, W), jnp.float32)

    bound = 1.0 / np.sqrt(C_in * 3 * 3)
    w = jax.random.uniform(ks[1], (C_out, C_in, 3, 3), jnp.float32, -bound, bound)
    gamma = jax.random.uniform(ks[2], (C_out,), jnp.float32, 0.5, 1.5)
    beta = 0.1 * jax.random.normal(ks[3], (C_out,), jnp.float32)

    # bf16-quantized operands (what the kernel feeds the MXU) for a tight check.
    xq = x.astype(jnp.bfloat16).astype(jnp.float32)
    wq = w.astype(jnp.bfloat16).astype(jnp.float32)

    # --- config 1: 3x3, stride 1, pad 1 (typical ResNet ConvBlock) ----------
    out = jax.block_until_ready(conv_block(x, w, gamma, beta,
                                           stride=1, padding=1))
    assert out.shape == (N, C_out, H, W)
    ref_q = conv_block_reference(xq, wq, gamma, beta, stride=1, padding=1)
    ref_f = conv_block_reference(x, w, gamma, beta, stride=1, padding=1)
    # Tight: kernel vs. reference with identically bf16-quantized conv operands.
    np.testing.assert_allclose(np.asarray(out), np.asarray(ref_q),
                               rtol=1e-3, atol=1e-3)
    # Loose: kernel vs. full-f32 module semantics (bf16 operand drift only).
    np.testing.assert_allclose(np.asarray(out), np.asarray(ref_f),
                               rtol=5e-2, atol=5e-2)

    # Forced multi-tile grid (exercises cross-tile BN accumulators / 2 phases).
    out_tiled = jax.block_until_ready(
        conv_block(x, w, gamma, beta, stride=1, padding=1, lane_tile=128))
    np.testing.assert_allclose(np.asarray(out_tiled), np.asarray(out),
                               rtol=1e-5, atol=1e-5)

    # --- config 2: 3x3, stride 2, pad 1, C_out=8 -----------------------------
    C_out2 = 8
    w2 = jax.random.uniform(ks[4], (C_out2, C_in, 3, 3), jnp.float32,
                            -bound, bound)
    g2 = jax.random.uniform(ks[5], (C_out2,), jnp.float32, 0.5, 1.5)
    b2 = 0.1 * jax.random.normal(ks[6], (C_out2,), jnp.float32)
    out2 = jax.block_until_ready(conv_block(x, w2, g2, b2,
                                            stride=2, padding=1))
    assert out2.shape == (N, C_out2, H // 2, W // 2)
    ref2_q = conv_block_reference(
        xq, w2.astype(jnp.bfloat16).astype(jnp.float32), g2, b2,
        stride=2, padding=1)
    np.testing.assert_allclose(np.asarray(out2), np.asarray(ref2_q),
                               rtol=1e-3, atol=1e-3)

    print("KERNEL_OK")
</pallas_src>

<mosaic_0001>
module attributes {stable_mosaic.version = 11 : i64} {
  func.func @_conv_bn_act_kernel(%arg0: i32, %arg1: i32, %arg2: memref<48x512xbf16, #tpu.memory_space<vmem>>, %arg3: memref<4x48xbf16, #tpu.memory_space<vmem>>, %arg4: memref<4x1xf32, #tpu.memory_space<vmem>>, %arg5: memref<4x1xf32, #tpu.memory_space<vmem>>, %arg6: memref<4x512xf32, #tpu.memory_space<vmem>>, %arg7: memref<4x1xf32, #tpu.memory_space<vmem>>, %arg8: memref<4x1xf32, #tpu.memory_space<vmem>>) attributes {dimension_semantics = [#tpu.dimension_semantics<arbitrary>, #tpu.dimension_semantics<arbitrary>], iteration_bounds = array<i64: 2, 1>, scalar_prefetch = 0 : i64, scratch_operands = 2 : i64, tpu.core_type = #tpu.core_type<tc>, window_params = [{transform_indices = @transform_0, window_bounds = array<i64: 48, 512>}, {pipeline_mode = #tpu.pipeline_mode<synchronous>, transform_indices = @transform_1, window_bounds = array<i64: 4, 48>}, {pipeline_mode = #tpu.pipeline_mode<synchronous>, transform_indices = @transform_2, window_bounds = array<i64: 4, 1>}, {pipeline_mode = #tpu.pipeline_mode<synchronous>, transform_indices = @transform_3, window_bounds = array<i64: 4, 1>}, {transform_indices = @transform_4, window_bounds = array<i64: 4, 512>}]} {
    %c0 = arith.constant 0 : index
    %c0_0 = arith.constant 0 : index
    %0 = vector.load %arg3[%c0, %c0_0] : memref<4x48xbf16, #tpu.memory_space<vmem>>, vector<4x48xbf16>
    %c0_1 = arith.constant 0 : index
    %c0_2 = arith.constant 0 : index
    %1 = vector.load %arg2[%c0_1, %c0_2] : memref<48x512xbf16, #tpu.memory_space<vmem>>, vector<48x512xbf16>
    %cst = arith.constant dense<0.000000e+00> : vector<4x512xf32>
    %2 = tpu.matmul %0, %1, %cst {dimension_numbers = #tpu.dot_dimension_numbers<[1], [0], [0], [1], [0, 0, 1, 1], [], []>} : vector<4x48xbf16>, vector<48x512xbf16>, vector<4x512xf32> -> vector<4x512xf32>
    %c0_i32 = arith.constant 0 : i32
    %3 = arith.cmpi eq, %arg0, %c0_i32 : i32
    %c0_i32_3 = arith.constant 0 : i32
    %4 = arith.cmpi eq, %arg1, %c0_i32_3 : i32
    %5 = arith.andi %3, %4 : i1
    %6 = arith.extui %5 : i1 to i32
    %c0_i32_4 = arith.constant 0 : i32
    %7 = arith.cmpi ne, %6, %c0_i32_4 : i32
    scf.if %7 {
      %cst_8 = arith.constant 0.000000e+00 : f32
      %14 = vector.broadcast %cst_8 : f32 to vector<4x1xf32>
      %c0_9 = arith.constant 0 : index
      %c0_10 = arith.constant 0 : index
      %15 = vector.load %arg7[%c0_9, %c0_10] : memref<4x1xf32, #tpu.memory_space<vmem>>, vector<4x1xf32>
      tpu.vector_store %arg7[%c0_9, %c0_10], %14 {strides = array<i32>} : memref<4x1xf32, #tpu.memory_space<vmem>>, vector<4x1xf32>,
      %cst_11 = arith.constant 0.000000e+00 : f32
      %16 = vector.broadcast %cst_11 : f32 to vector<4x1xf32>
      %c0_12 = arith.constant 0 : index
      %c0_13 = arith.constant 0 : index
      %17 = vector.load %arg8[%c0_12, %c0_13] : memref<4x1xf32, #tpu.memory_space<vmem>>, vector<4x1xf32>
      tpu.vector_store %arg8[%c0_12, %c0_13], %16 {strides = array<i32>} : memref<4x1xf32, #tpu.memory_space<vmem>>, vector<4x1xf32>,
    } else {
    }
    %c0_i32_5 = arith.constant 0 : i32
    %8 = arith.cmpi eq, %arg0, %c0_i32_5 : i32
    %9 = arith.extui %8 : i1 to i32
    %c0_i32_6 = arith.constant 0 : i32
    %10 = arith.cmpi ne, %9, %c0_i32_6 : i32
    scf.if %10 {
      %c0_8 = arith.constant 0 : index
      %c0_9 = arith.constant 0 : index
      %14 = vector.load %arg7[%c0_8, %c0_9] : memref<4x1xf32, #tpu.memory_space<vmem>>, vector<4x1xf32>
      %cst_10 = arith.constant dense<0.000000e+00> : vector<4xf32>
      %15 = vector.multi_reduction <add>, %2, %cst_10 [1] : vector<4x512xf32> to vector<4xf32>
      %16 = vector.shape_cast %15 : vector<4xf32> to vector<4x1xf32>
      %17 = arith.addf %14, %16 : vector<4x1xf32>
      %c0_11 = arith.constant 0 : index
      %c0_12 = arith.constant 0 : index
      %18 = vector.load %arg7[%c0_11, %c0_12] : memref<4x1xf32, #tpu.memory_space<vmem>>, vector<4x1xf32>
      tpu.vector_store %arg7[%c0_11, %c0_12], %17 {strides = array<i32>} : memref<4x1xf32, #tpu.memory_space<vmem>>, vector<4x1xf32>,
      %c0_13 = arith.constant 0 : index
      %c0_14 = arith.constant 0 : index
      %19 = vector.load %arg8[%c0_13, %c0_14] : memref<4x1xf32, #tpu.memory_space<vmem>>, vector<4x1xf32>
      %20 = arith.mulf %2, %2 : vector<4x512xf32>
      %cst_15 = arith.constant dense<0.000000e+00> : vector<4xf32>
      %21 = vector.multi_reduction <add>, %20, %cst_15 [1] : vector<4x512xf32> to vector<4xf32>
      %22 = vector.shape_cast %21 : vector<4xf32> to vector<4x1xf32>
      %23 = arith.addf %19, %22 : vector<4x1xf32>
      %c0_16 = arith.constant 0 : index
      %c0_17 = arith.constant 0 : index
      %24 = vector.load %arg8[%c0_16, %c0_17] : memref<4x1xf32, #tpu.memory_space<vmem>>, vector<4x1xf32>
      tpu.vector_store %arg8[%c0_16, %c0_17], %23 {strides = array<i32>} : memref<4x1xf32, #tpu.memory_space<vmem>>, vector<4x1xf32>,
      %c0_18 = arith.constant 0 : index
      %c0_19 = arith.constant 0 : index
      %25 = vector.load %arg6[%c0_18, %c0_19] : memref<4x512xf32, #tpu.memory_space<vmem>>, vector<4x512xf32>
      tpu.vector_store %arg6[%c0_18, %c0_19], %2 {strides = array<i32>} : memref<4x512xf32, #tpu.memory_space<vmem>>, vector<4x512xf32>,
    } else {
    }
    %c1_i32 = arith.constant 1 : i32
    %11 = arith.cmpi eq, %arg0, %c1_i32 : i32
    %12 = arith.extui %11 : i1 to i32
    %c0_i32_7 = arith.constant 0 : i32
    %13 = arith.cmpi ne, %12, %c0_i32_7 : i32
    scf.if %13 {
      %c0_8 = arith.constant 0 : index
      %c0_9 = arith.constant 0 : index
      %14 = vector.load %arg7[%c0_8, %c0_9] : memref<4x1xf32, #tpu.memory_space<vmem>>, vector<4x1xf32>
      %cst_10 = arith.constant 0.001953125 : f32
      %15 = vector.broadcast %cst_10 : f32 to vector<4x1xf32>
      %16 = arith.mulf %14, %15 : vector<4x1xf32>
      %c0_11 = arith.constant 0 : index
      %c0_12 = arith.constant 0 : index
      %17 = vector.load %arg8[%c0_11, %c0_12] : memref<4x1xf32, #tpu.memory_space<vmem>>, vector<4x1xf32>
      %cst_13 = arith.constant 0.001953125 : f32
      %18 = vector.broadcast %cst_13 : f32 to vector<4x1xf32>
      %19 = arith.mulf %17, %18 : vector<4x1xf32>
      %20 = arith.mulf %16, %16 : vector<4x1xf32>
      %21 = arith.subf %19, %20 : vector<4x1xf32>
      %c0_14 = arith.constant 0 : index
      %c0_15 = arith.constant 0 : index
      %22 = vector.load %arg4[%c0_14, %c0_15] : memref<4x1xf32, #tpu.memory_space<vmem>>, vector<4x1xf32>
      %cst_16 = arith.constant 9.99999974E-6 : f32
      %23 = vector.broadcast %cst_16 : f32 to vector<4x1xf32>
      %24 = arith.addf %21, %23 : vector<4x1xf32>
      %25 = math.rsqrt %24 : vector<4x1xf32>
      %26 = arith.mulf %22, %25 : vector<4x1xf32>
      %c0_17 = arith.constant 0 : index
      %c0_18 = arith.constant 0 : index
      %27 = vector.load %arg5[%c0_17, %c0_18] : memref<4x1xf32, #tpu.memory_space<vmem>>, vector<4x1xf32>
      %28 = arith.mulf %16, %26 : vector<4x1xf32>
      %29 = arith.subf %27, %28 : vector<4x1xf32>
      %30 = vector.broadcast %26 : vector<4x1xf32> to vector<4x512xf32>
      %31 = arith.mulf %2, %30 : vector<4x512xf32>
      %32 = vector.broadcast %29 : vector<4x1xf32> to vector<4x512xf32>
      %33 = arith.addf %31, %32 : vector<4x512xf32>
      %cst_19 = arith.constant 0.000000e+00 : f32
      %34 = vector.broadcast %cst_19 : f32 to vector<4x512xf32>
      %35 = arith.maximumf %33, %34 : vector<4x512xf32>
      %c0_20 = arith.constant 0 : index
      %c0_21 = arith.constant 0 : index
      %36 = vector.load %arg6[%c0_20, %c0_21] : memref<4x512xf32, #tpu.memory_space<vmem>>, vector<4x512xf32>
      tpu.vector_store %arg6[%c0_20, %c0_21], %35 {strides = array<i32>} : memref<4x512xf32, #tpu.memory_space<vmem>>, vector<4x512xf32>,
    } else {
    }
    return
  }
  func.func @transform_0(%arg0: i32, %arg1: i32) -> (i32, i32) {
    %c0_i32 = arith.constant 0 : i32
    %c0_i32_0 = arith.constant 0 : i32
    return %c0_i32, %arg1 : i32, i32
  }
  func.func @transform_1(%arg0: i32, %arg1: i32) -> (i32, i32) {
    %c0_i32 = arith.constant 0 : i32
    %c0_i32_0 = arith.constant 0 : i32
    %c0_i32_1 = arith.constant 0 : i32
    return %c0_i32, %c0_i32_0 : i32, i32
  }
  func.func @transform_2(%arg0: i32, %arg1: i32) -> (i32, i32) {
    %c0_i32 = arith.constant 0 : i32
    %c0_i32_0 = arith.constant 0 : i32
    %c0_i32_1 = arith.constant 0 : i32
    return %c0_i32, %c0_i32_0 : i32, i32
  }
  func.func @transform_3(%arg0: i32, %arg1: i32) -> (i32, i32) {
    %c0_i32 = arith.constant 0 : i32
    %c0_i32_0 = arith.constant 0 : i32
    %c0_i32_1 = arith.constant 0 : i32
    return %c0_i32, %c0_i32_0 : i32, i32
  }
  func.func @transform_4(%arg0: i32, %arg1: i32) -> (i32, i32) {
    %c0_i32 = arith.constant 0 : i32
    %c0_i32_0 = arith.constant 0 : i32
    return %c0_i32, %arg1 : i32, i32
  }
}

</mosaic_0001>

<llo_original>
// kernel: conv_block.1
$region0: #{conv_block.1}
  #allocation0 [shape = 'u32[]', space=smem, size = 0x4, offset = 0x4, fixed_abs, tag = 'smem constant byte address 0x4 - core index']
  #allocation1 [shape = 'u32[144,128]{1,0:T(1,128)}', space=vmem, size = 0x12000, scoped, tag = 'internal scratch']
  #allocation2 [shape = 'f32[4,1]{1,0:T(4,128)}', space=vmem, size = 0x800, scoped, tag = 'scratch operand']
  #allocation3 [shape = 'f32[4,1]{1,0:T(4,128)}', space=vmem, size = 0x800, scoped, tag = 'scratch operand']
  %s0 = inlined_call_operand.vmem [shape: bf16[48,512], index: 0, kind: input, shape index: {}]
  %s1 = inlined_call_operand.vmem [shape: bf16[4,48], index: 1, kind: input, shape index: {}]
  %s2 = inlined_call_operand.vmem [shape: f32[4,1], index: 2, kind: input, shape index: {}]
  %s3 = inlined_call_operand.vmem [shape: f32[4,1], index: 3, kind: input, shape index: {}]
  %s4 = inlined_call_operand.vmem [shape: f32[4,512], index: 4, kind: output, shape index: {}]
  %s5 = sld [smem:[#allocation0]]
  $region61: #{conv_block.1} parent=0
    _
  %s7 = ssub.s32 1, %s5
  %s8 = scalar_select 0, %s7, %s5
  loop: start=0, step=1, limit=4
  $region2: #{conv_block.1} parent=0 // loop_pre_header
    _
  $region3: #{conv_block.1} parent=0 // loop_header
    %s10 = sphi 0, %s14
    %p11 = scmp.ge.s32.totalorder %s10, 4
    %s17 = sphi 0, %s29
    %s18 = sphi 0, %s25
    %s19 = sphi 0, %s17
    %s20 = sphi 0, %s18
    %s21 = sphi 0, %s19
    %s22 = sphi 0, %s20
    %s32 = sphi 0, %s34
    %s35 = sphi 0, %s32
    %s36 = sphi 0, %s35
    %s52 = sphi 0, %s36
    %s56 = sphi 0, %s56
    %s58 = sphi 0, %s56
    %s59 = sphi 0, %s58
    %s73 = sphi 0, %s59
    %s77 = sphi 0, %s77
    %s79 = sphi 0, %s77
    %s80 = sphi 0, %s79
    %s94 = sphi 0, %s80
    %s98 = sphi 0, %s98
    %s100 = sphi 0, %s98
    %s101 = sphi 0, %s100
    %s115 = sphi 0, %s101
    %s121 = sphi 0, %s123
    %s124 = sphi 0, %s121
    %s125 = sphi 0, %s124
    %s141 = sphi 0, %s125
  $region4: #{conv_block.1} parent=0 // loop_header_branch
    %13 = sbr.rel (%p11) target = $region8
  $region5: #{conv_block.1} parent=0 // loop_body
    %s15 = ssub.s32 %s10, 1
    %s16 = ssub.s32 %s10, 2
    %s23 = sadd.s32 1, %s18
    %p24 = scmp.ge.s32.totalorder %s23, 1
    %s25 = scalar_select %p24, 0, %s23
    %s26 = sadd.s32 1, %s17
    %s27 = scalar_select %p24, %s26, %s17
    %p28 = scmp.ge.s32.totalorder %s27, 2
    %s29 = scalar_select %p28, 0, %s27
    %s30 = ssub.s32 %s18, %s25
    %p31 = scmp.eq.s32.totalorder %s30, 0
    %s33 = sadd.s32 %s32, 1
    %s34 = scalar_select %p31, %s32, %s33
    %p37 = pneg %p31
    %p38 = scmp.eq.s32.totalorder %s10, 1
    %p39 = por %p37, %p38
    %p40 = scmp.ne.s32.totalorder %s32, %s35
    %p41 = scmp.eq.s32.totalorder %s10, 0
    %p42 = por %p40, %p41
    %p43 = scmp.ne.s32.totalorder %s32, %s35
    %p44 = scmp.eq.s32.totalorder %s15, 1
    %p45 = por %p43, %p44
    %p46 = scmp.ne.s32.totalorder %s35, %s36
    %p47 = scmp.eq.s32.totalorder %s15, 0
    %p48 = por %p46, %p47
    %p49 = scmp.ne.s32.totalorder %s35, %s36
    %p50 = scmp.eq.s32.totalorder %s16, 1
    %p51 = por %p49, %p50
    %p53 = scmp.ne.s32.totalorder %s36, %s52
    %p54 = scmp.eq.s32.totalorder %s16, 0
    %p55 = por %p53, %p54
    %s57 = sadd.s32 %s56, 1
    %p60 = scmp.eq.s32.totalorder %s10, 1
    %p61 = scmp.ne.s32.totalorder %s56, %s58
    %p62 = scmp.eq.s32.totalorder %s10, 0
    %p63 = por %p61, %p62
    %p64 = scmp.ne.s32.totalorder %s56, %s58
    %p65 = scmp.eq.s32.totalorder %s15, 1
    %p66 = por %p64, %p65
    %p67 = scmp.ne.s32.totalorder %s58, %s59
    %p68 = scmp.eq.s32.totalorder %s15, 0
    %p69 = por %p67, %p68
    %p70 = scmp.ne.s32.totalorder %s58, %s59
    %p71 = scmp.eq.s32.totalorder %s16, 1
    %p72 = por %p70, %p71
    %p74 = scmp.ne.s32.totalorder %s59, %s73
    %p75 = scmp.eq.s32.totalorder %s16, 0
    %p76 = por %p74, %p75
    %s78 = sadd.s32 %s77, 1
    %p81 = scmp.eq.s32.totalorder %s10, 1
    %p82 = scmp.ne.s32.totalorder %s77, %s79
    %p83 = scmp.eq.s32.totalorder %s10, 0
    %p84 = por %p82, %p83
    %p85 = scmp.ne.s32.totalorder %s77, %s79
    %p86 = scmp.eq.s32.totalorder %s15, 1
    %p87 = por %p85, %p86
    %p88 = scmp.ne.s32.totalorder %s79, %s80
    %p89 = scmp.eq.s32.totalorder %s15, 0
    %p90 = por %p88, %p89
    %p91 = scmp.ne.s32.totalorder %s79, %s80
    %p92 = scmp.eq.s32.totalorder %s16, 1
    %p93 = por %p91, %p92
    %p95 = scmp.ne.s32.totalorder %s80, %s94
    %p96 = scmp.eq.s32.totalorder %s16, 0
    %p97 = por %p95, %p96
    %s99 = sadd.s32 %s98, 1
    %p102 = scmp.eq.s32.totalorder %s10, 1
    %p103 = scmp.ne.s32.totalorder %s98, %s100
    %p104 = scmp.eq.s32.totalorder %s10, 0
    %p105 = por %p103, %p104
    %p106 = scmp.ne.s32.totalorder %s98, %s100
    %p107 = scmp.eq.s32.totalorder %s15, 1
    %p108 = por %p106, %p107
    %p109 = scmp.ne.s32.totalorder %s100, %s101
    %p110 = scmp.eq.s32.totalorder %s15, 0
    %p111 = por %p109, %p110
    %p112 = scmp.ne.s32.totalorder %s100, %s101
    %p113 = scmp.eq.s32.totalorder %s16, 1
    %p114 = por %p112, %p113
    %p116 = scmp.ne.s32.totalorder %s101, %s115
    %p117 = scmp.eq.s32.totalorder %s16, 0
    %p118 = por %p116, %p117
    %s119 = ssub.s32 %s18, %s25
    %p120 = scmp.eq.s32.totalorder %s119, 0
    %s122 = sadd.s32 %s121, 1
    %s123 = scalar_select %p120, %s121, %s122
    %p126 = pneg %p120
    %p127 = scmp.eq.s32.totalorder %s10, 1
    %p128 = por %p126, %p127
    %p129 = scmp.ne.s32.totalorder %s121, %s124
    %p130 = scmp.eq.s32.totalorder %s10, 0
    %p131 = por %p129, %p130
    %p132 = scmp.ne.s32.totalorder %s121, %s124
    %p133 = scmp.eq.s32.totalorder %s15, 1
    %p134 = por %p132, %p133
    %p135 = scmp.ne.s32.totalorder %s124, %s125
    %p136 = scmp.eq.s32.totalorder %s15, 0
    %p137 = por %p135, %p136
    %p138 = scmp.ne.s32.totalorder %s124, %s125
    %p139 = scmp.eq.s32.totalorder %s16, 1
    %p140 = por %p138, %p139
    %p142 = scmp.ne.s32.totalorder %s125, %s141
    %p143 = scmp.eq.s32.totalorder %s16, 0
    %p144 = por %p142, %p143
    %p145 = scmp.le.s32.totalorder 1, %s10
    %p146 = scmp.lt.s32.totalorder %s10, 3
    %p147 = pnand %p145, %p146
    %p148 = pneg %p147
    // Predicated region
    $region9: #{conv_block.1} parent=5 // pred_check
      _
    $region10: #{conv_block.1} parent=5 // pred_check_branch
      %150 = sbr.rel (%p147) target = $region12
    $region11: #{conv_block.1} parent=5 // pred_region
      %s151 = ssub.s32 %s10, 1
      // Predicated region
      $region13: #{conv_block.1} parent=11 // pred_check
        %p152 = pneg %p48
      $region14: #{conv_block.1} parent=11 // pred_check_branch
        %154 = sbr.rel (%p152) target = $region16
      $region15: #{conv_block.1} parent=11 // pred_region
        %s155 = smul.u32 4, %s20
        %p156 = scmp.lt.s32.totalorder %s155, 3
        %s157 = scalar_select %p156, %s155, 3
        %s158 = smul.addr %s157, 4
        %s159 = scalar_lea.vmem %s0, %s158
        %s160 = smul.u32 4, %s20
      $region16: #{conv_block.1} parent=11 // pred_fallthru
        _
      // Predicated region
      $region17: #{conv_block.1} parent=11 // pred_check
        %p161 = pneg %p69
      $region18: #{conv_block.1} parent=11 // pred_check_branch
        %163 = sbr.rel (%p161) target = $region20
      $region19: #{conv_block.1} parent=11 // pred_region
        _
      $region20: #{conv_block.1} parent=11 // pred_fallthru
        _
      // Predicated region
      $region21: #{conv_block.1} parent=11 // pred_check
        %p164 = pneg %p90
      $region22: #{conv_block.1} parent=11 // pred_check_branch
        %166 = sbr.rel (%p164) target = $region24
      $region23: #{conv_block.1} parent=11 // pred_region
        _
      $region24: #{conv_block.1} parent=11 // pred_fallthru
        _
      // Predicated region
      $region25: #{conv_block.1} parent=11 // pred_check
        %p167 = pneg %p111
      $region26: #{conv_block.1} parent=11 // pred_check_branch
        %169 = sbr.rel (%p167) target = $region28
      $region27: #{conv_block.1} parent=11 // pred_region
        _
      $region28: #{conv_block.1} parent=11 // pred_fallthru
        _
    $region12: #{conv_block.1} parent=5 // pred_fallthru
      _
    %p170 = scmp.lt.s32.totalorder %s10, 2
    // Predicated region
    $region29: #{conv_block.1} parent=5 // pred_check
      %p171 = pneg %p170
    $region30: #{conv_block.1} parent=5 // pred_check_branch
      %173 = sbr.rel (%p171) target = $region32
    $region31: #{conv_block.1} parent=5 // pred_region
      _
    $region32: #{conv_block.1} parent=5 // pred_fallthru
      _
    %p174 = scmp.le.s32.totalorder 1, %s10
    %p175 = scmp.lt.s32.totalorder %s10, 3
    %p176 = pnand %p174, %p175
    %p177 = pneg %p176
    // Predicated region
    $region33: #{conv_block.1} parent=5 // pred_check
      _
    $region34: #{conv_block.1} parent=5 // pred_check_branch
      %179 = sbr.rel (%p176) target = $region36
    $region35: #{conv_block.1} parent=5 // pred_region
      %s180 = ssub.s32 %s10, 1
      %s181 = smul.u32 4, %s20
      %p182 = scmp.lt.s32.totalorder %s181, 3
      %s183 = scalar_select %p182, %s181, 3
      %s184 = smul.addr %s183, 4
      %s185 = scalar_lea.vmem %s0, %s184
      %p186 = pneg %p48
      %p187 = pneg %p45
      %p188 = pneg %p69
      %p189 = pneg %p66
      %p190 = pneg %p90
      %p191 = pneg %p87
      %p192 = pneg %p111
      %p193 = pneg %p108
      %p194 = pneg %p137
      %p195 = pneg %p134
      %s196 = smul.u32 4, %s20
      %p197 = scmp.lt.s32.totalorder %s196, 3
      %s198 = scalar_select %p197, %s196, 3
      %s199 = smul.addr %s198, 4
      %s200 = scalar_lea.vmem %s4, %s199
      %s201 = smul.u32 4, %s20
      %p202 = scmp.lt.s32.totalorder %s201, 3
      %s203 = scalar_select %p202, %s201, 3
      %s204 = smul.addr %s203, 4
      %s205 = scalar_lea.vmem %s0, %s204
      %s206 = smul.u32 4, %s20
      %s207 = smul.u32 4, %s20
      %p208 = scmp.lt.s32.totalorder %s207, 3
      %s209 = scalar_select %p208, %s207, 3
      %s210 = smul.addr %s209, 4
      %s211 = scalar_lea.vmem %s4, %s210
      %s212 = smul.u32 4, %s20
      %v214 = vld [vmem:[%s1] sm:$0x3]
      %v215 = vld [vmem:[%s205] sm:$0xff]
      %v216 = vld [vmem:[%s205 + $0x8] sm:$0xff]
      %v217 = vld [vmem:[%s205 + $0x10] sm:$0xff]
      %v218 = vld [vmem:[%s205 + $0x18] sm:$0xff]
      %v219 = vld [vmem:[%s205 + $0x20] sm:$0xff]
      %v220 = vld [vmem:[%s205 + $0x28] sm:$0xff]
      %v221 = vld [vmem:[%s205 + $0x30] sm:$0xff]
      %v222 = vld [vmem:[%s205 + $0x38] sm:$0xff]
      %v223 = vld [vmem:[%s205 + $0x40] sm:$0xff]
      %v224 = vld [vmem:[%s205 + $0x48] sm:$0xff]
      %v225 = vld [vmem:[%s205 + $0x50] sm:$0xff]
      %v226 = vld [vmem:[%s205 + $0x58] sm:$0xff]
      %v239 = vunpack.c.l.b16 %v215
      %v240 = vunpack.c.h.b16 %v215
      %v241 = vunpack.c.l.b16 %v216
      %v242 = vunpack.c.h.b16 %v216
      %v243 = vunpack.c.l.b16 %v217
      %v244 = vunpack.c.h.b16 %v217
      %v245 = vunpack.c.l.b16 %v218
      %v246 = vunpack.c.h.b16 %v218
      %v247 = vunpack.c.l.b16 %v219
      %v248 = vunpack.c.h.b16 %v219
      %v249 = vunpack.c.l.b16 %v220
      %v250 = vunpack.c.h.b16 %v220
      %v251 = vunpack.c.l.b16 %v221
      %v252 = vunpack.c.h.b16 %v221
      %v253 = vunpack.c.l.b16 %v222
      %v254 = vunpack.c.h.b16 %v222
      %v255 = vunpack.c.l.b16 %v223
      %v256 = vunpack.c.h.b16 %v223
      %v257 = vunpack.c.l.b16 %v224
      %v258 = vunpack.c.h.b16 %v224
      %v259 = vunpack.c.l.b16 %v225
      %v260 = vunpack.c.h.b16 %v225
      %v261 = vunpack.c.l.b16 %v226
      %v262 = vunpack.c.h.b16 %v226
      %v263 = vpack.c.b16 %v243, %v239
      %v264 = vpack.c.b16 %v244, %v240
      %v265 = vpack.c.b16 %v245, %v241
      %v266 = vpack.c.b16 %v246, %v242
      %v267 = vpack.c.b16 %v251, %v247
      %v268 = vpack.c.b16 %v252, %v248
      %v269 = vpack.c.b16 %v253, %v249
      %v270 = vpack.c.b16 %v254, %v250
      %v271 = vpack.c.b16 %v259, %v255
      %v272 = vpack.c.b16 %v260, %v256
      %v273 = vpack.c.b16 %v261, %v257
      %v274 = vpack.c.b16 %v262, %v258
      %vm287 = vcmask 392192
      %v289 = vsel %vm287, %v214, 0
      %291 = vmatprep.subr.bf16.mxu0 %v264
      %292 = vmatpush1.bf16.msra.mxu0 %v263
      %293 = vmatprep.subr.bf16.mxu0 %v268
      %294 = vmatpush1.bf16.msra.mxu0 %v267
      %295 = vmatprep.subr.bf16.mxu0 %v272
      %296 = vmatpush1.bf16.msra.mxu0 %v271
      %297 = vmatprep.subr.bf16.mxu0 0
      %298 = vmatpush1.bf16.msra.mxu0 0
      %299 = vmatprep.subr.bf16.mxu0 0
      %300 = vmatpush1.bf16.msra.mxu0 0
      %301 = vmatprep.subr.bf16.mxu0 0
      %302 = vmatpush1.bf16.msra.mxu0 0
      %303 = vmatprep.subr.bf16.mxu0 0
      %304 = vmatpush1.bf16.msra.mxu0 0
      %305 = vmatprep.subr.bf16.mxu0 0
      %306 = vmatpush1.bf16.msra.mxu0 0
      %307 = vmatprep.subr.bf16.mxu0 0
      %308 = vmatpush1.bf16.msra.mxu0 0
      %309 = vmatprep.subr.bf16.mxu0 0
      %310 = vmatpush1.bf16.msra.mxu0 0
      %311 = vmatprep.subr.bf16.mxu0 0
      %312 = vmatpush1.bf16.msra.mxu0 0
      %313 = vmatprep.subr.bf16.mxu0 0
      %314 = vmatpush1.bf16.msra.mxu0 0
      %315 = vmatprep.subr.bf16.mxu0 0
      %316 = vmatpush1.bf16.msra.mxu0 0
      %317 = vmatprep.subr.bf16.mxu0 0
      %318 = vmatpush1.bf16.msra.mxu0 0
      %319 = vmatprep.subr.bf16.mxu0 0
      %320 = vmatpush1.bf16.msra.mxu0 0
      %321 = vmatprep.subr.bf16.mxu0 0
      %322 = vmatpush1.bf16.msra.mxu0 0
      %323 = vmatprep.mubr.bf16.mxu0 0
      %324 = vmatmul.mubr.bf16.gmra.mrb[0].mxu0 %v289
      %v325 = vpop.f32.mrb[0].mxu0
      %v326 = vadd.f32 0.0, %v325
      %v327 = vpop.f32.mrb[0].mxu0
      %v328 = vadd.f32 0.0, %v327
      %v329 = vpop.f32.mrb[0].mxu0
      %v330 = vpop.f32.mrb[0].mxu0
      %331 = vdwg.mxu0
      %332 = vmatprep.subr.bf16.mxu0 %v266
      %333 = vmatpush1.bf16.msra.mxu0 %v265
      %334 = vmatprep.subr.bf16.mxu0 %v270
      %335 = vmatpush1.bf16.msra.mxu0 %v269
      %336 = vmatprep.subr.bf16.mxu0 %v274
      %337 = vmatpush1.bf16.msra.mxu0 %v273
      %338 = vmatprep.subr.bf16.mxu0 0
      %339 = vmatpush1.bf16.msra.mxu0 0
      %340 = vmatprep.subr.bf16.mxu0 0
      %341 = vmatpush1.bf16.msra.mxu0 0
      %342 = vmatprep.subr.bf16.mxu0 0
      %343 = vmatpush1.bf16.msra.mxu0 0
      %344 = vmatprep.subr.bf16.mxu0 0
      %345 = vmatpush1.bf16.msra.mxu0 0
      %346 = vmatprep.subr.bf16.mxu0 0
      %347 = vmatpush1.bf16.msra.mxu0 0
      %348 = vmatprep.subr.bf16.mxu0 0
      %349 = vmatpush1.bf16.msra.mxu0 0
      %350 = vmatprep.subr.bf16.mxu0 0
      %351 = vmatpush1.bf16.msra.mxu0 0
      %352 = vmatprep.subr.bf16.mxu0 0
      %353 = vmatpush1.bf16.msra.mxu0 0
      %354 = vmatprep.subr.bf16.mxu0 0
      %355 = vmatpush1.bf16.msra.mxu0 0
      %356 = vmatprep.subr.bf16.mxu0 0
      %357 = vmatpush1.bf16.msra.mxu0 0
      %358 = vmatprep.subr.bf16.mxu0 0
      %359 = vmatpush1.bf16.msra.mxu0 0
      %360 = vmatprep.subr.bf16.mxu0 0
      %361 = vmatpush1.bf16.msra.mxu0 0
      %362 = vmatprep.subr.bf16.mxu0 0
      %363 = vmatpush1.bf16.msra.mxu0 0
      %364 = vmatprep.mubr.bf16.mxu0 0
      %365 = vmatmul.mubr.bf16.gmra.mrb[0].mxu0 %v289
      %v366 = vpop.f32.mrb[0].mxu0
      %v367 = vadd.f32 0.0, %v366
      %v368 = vpop.f32.mrb[0].mxu0
      %v369 = vadd.f32 0.0, %v368
      %v370 = vpop.f32.mrb[0].mxu0
      %v371 = vpop.f32.mrb[0].mxu0
      %372 = vdwg.mxu0
      %p373 = scmp.eq.s32.totalorder %s19, 0
      %p374 = scmp.eq.s32.totalorder %s20, 0
      %p375 = pnand %p373, %p374
      %p376 = pneg %p375
      // Predicated region
      $region37: #{conv_block.1} parent=35 // pred_check
        _
      $region38: #{conv_block.1} parent=35 // pred_check_branch
        %378 = sbr.rel (%p375) target = $region40
      $region39: #{conv_block.1} parent=35 // pred_region
        %vm379 = vcmask 3072
        %380 = vst.msk [vmem:[#allocation2] sm:$0xf] %vm379, 0.0
        %381 = vst.msk [vmem:[#allocation3] sm:$0xf] %vm379, 0.0
      $region40: #{conv_block.1} parent=35 // pred_fallthru
        _
      // Predicated region
      $region41: #{conv_block.1} parent=35 // pred_check
        %p382 = pneg %p373
      $region42: #{conv_block.1} parent=35 // pred_check_branch
        %384 = sbr.rel (%p382) target = $region44
      $region43: #{conv_block.1} parent=35 // pred_region
        %v385 = vld [vmem:[#allocation2] sm:$0xf]
        %vm386 = vcmask 1043456
        %v387 = vsel %vm386, %v326, 0.0
        %v388 = vsel %vm386, %v328, 0.0
        %v389 = vadd.f32 %v387, %v388
        %v390 = vsel %vm386, %v367, 0.0
        %v391 = vadd.f32 %v389, %v390
        %v392 = vsel %vm386, %v369, 0.0
        %v393 = vadd.f32 %v391, %v392
        %394 = vadd.xlane.f32.xlu0 %v393
        %v395 = vpop.xlane.xlu0 %394
        %v396 = vadd.f32 %v385, %v395
        %vm397 = vcmask 3072
        %398 = vst.msk [vmem:[#allocation2] sm:$0xf] %vm397, %v396
        %v399 = vld [vmem:[#allocation3] sm:$0xf]
        %v400 = vmul.f32 %v326, %v326
        %v401 = vmul.f32 %v328, %v328
        %v402 = vmul.f32 %v367, %v367
        %v403 = vmul.f32 %v369, %v369
        %v404 = vsel %vm386, %v400, 0.0
        %v405 = vsel %vm386, %v401, 0.0
        %v406 = vadd.f32 %v404, %v405
        %v407 = vsel %vm386, %v402, 0.0
        %v408 = vadd.f32 %v406, %v407
        %v409 = vsel %vm386, %v403, 0.0
        %v410 = vadd.f32 %v408, %v409
        %411 = vadd.xlane.f32.xlu0 %v410
        %v412 = vpop.xlane.xlu0 %411
        %v413 = vadd.f32 %v399, %v412
        %414 = vst.msk [vmem:[#allocation3] sm:$0xf] %vm397, %v413
        %v419 = vcombine.low %v326, %v328
        %v420 = vcombine.low %v367, %v369
        %423 = vst [vmem:[%s211] sm:$0xff] %v419
        %424 = vst [vmem:[%s211 + $0x8] sm:$0xff] %v420
      $region44: #{conv_block.1} parent=35 // pred_fallthru
        _
      %p425 = scmp.eq.s32.totalorder %s19, 1
      // Predicated region
      $region45: #{conv_block.1} parent=35 // pred_check
        %p426 = pneg %p425
      $region46: #{conv_block.1} parent=35 // pred_check_branch
        %428 = sbr.rel (%p426) target = $region48
      $region47: #{conv_block.1} parent=35 // pred_region
        %v429 = vld [vmem:[#allocation2] sm:$0xf]
        %v430 = vmul.f32 %v429, 0.001953125
        %v431 = vld [vmem:[#allocation3] sm:$0xf]
        %v432 = vmul.f32 %v431, 0.001953125
        %v433 = vmul.f32 %v430, %v430
        %v434 = vsub.f32 %v432, %v433
        %v435 = vld [vmem:[%s2] sm:$0xf]
        %v436 = vadd.f32 %v434, 1e-05
        %v437 = vrsqrt.pop %v436
        %v438 = vmul.f32 %v435, %v437
        %v439 = vld [vmem:[%s3] sm:$0xf]
        %v440 = vmul.f32 %v430, %v438
        %v441 = vsub.f32 %v439, %v440
        %443 = vset.pattern.permute.xlu0 0
        %444 = vperm.xlu0 %443, %v438
        %v445 = vpop.permute.xlu0 %444
        %v447 = vmul.f32 %v326, %v445
        %v448 = vmul.f32 %v328, %v445
        %v449 = vmul.f32 %v367, %v445
        %v450 = vmul.f32 %v369, %v445
        %452 = vset.pattern.permute.xlu0 0
        %453 = vperm.xlu0 %452, %v441
        %v454 = vpop.permute.xlu0 %453
        %v456 = vadd.f32 %v447, %v454
        %v457 = vadd.f32 %v448, %v454
        %v458 = vadd.f32 %v449, %v454
        %v459 = vadd.f32 %v450, %v454
        %v460 = vmax.f32 %v456, 0.0
        %v461 = vmax.f32 %v457, 0.0
        %v462 = vmax.f32 %v458, 0.0
        %v463 = vmax.f32 %v459, 0.0
        %v468 = vcombine.low %v460, %v461
        %v469 = vcombine.low %v462, %v463
        %472 = vst [vmem:[%s211] sm:$0xff] %v468
        %473 = vst [vmem:[%s211 + $0x8] sm:$0xff] %v469
      $region48: #{conv_block.1} parent=35 // pred_fallthru
        _
      %s474 = smul.u32 4, %s20
      %p475 = scmp.lt.s32.totalorder %s474, 3
      %s476 = scalar_select %p475, %s474, 3
      %s477 = smul.addr %s476, 4
      %s478 = scalar_lea.vmem %s4, %s477
      // Predicated region
      $region49: #{conv_block.1} parent=35 // pred_check
        %p479 = pneg %p134
      $region50: #{conv_block.1} parent=35 // pred_check_branch
        %481 = sbr.rel (%p479) target = $region52
      $region51: #{conv_block.1} parent=35 // pred_region
        %s482 = smul.u32 4, %s20
      $region52: #{conv_block.1} parent=35 // pred_fallthru
        _
      // Predicated region
      $region53: #{conv_block.1} parent=35 // pred_check
        %p483 = pneg %p134
      $region54: #{conv_block.1} parent=35 // pred_check_branch
        %485 = sbr.rel (%p483) target = $region56
      $region55: #{conv_block.1} parent=35 // pred_region
        %s486 = smul.u32 4, %s20
        %p487 = scmp.lt.s32.totalorder %s486, 3
        %s488 = scalar_select %p487, %s486, 3
        %s489 = smul.addr %s488, 4
        %s490 = scalar_lea.vmem %s4, %s489
      $region56: #{conv_block.1} parent=35 // pred_fallthru
        _
    $region36: #{conv_block.1} parent=5 // pred_fallthru
      _
    %p491 = scmp.le.s32.totalorder 2, %s10
    // Predicated region
    $region57: #{conv_block.1} parent=5 // pred_check
      %p492 = pneg %p491
    $region58: #{conv_block.1} parent=5 // pred_check_branch
      %494 = sbr.rel (%p492) target = $region60
    $region59: #{conv_block.1} parent=5 // pred_region
      %s495 = ssub.s32 %s10, 2
    $region60: #{conv_block.1} parent=5 // pred_fallthru
      _
  $region6: #{conv_block.1} parent=0 // loop_footer
    %s14 = sadd.s32 1, %s10
  $region7: #{conv_block.1} parent=0 // loop_footer_branch
    %9 = sbr.rel target = $region3
  $region8: #{conv_block.1} parent=0 // loop_exit
    _

</llo_original>
